<compile_context>
chip_gen: v7x
topology: tpu7x:2x2x1
jax: 0.10.0
libtpu: 0.0.40
codegen_flags: <defaults>
</compile_context>

<pallas_src>
import jax
import jax.numpy as jnp
from jax.experimental import pallas as pl
from jax.experimental.pallas import tpu as pltpu

TAU = 2.0
V_THRESHOLD = 1.0

_LANES = 128
_TARGET_TILE_ROWS = 4096          # (4096, 128) f32 block = 2 MiB
_MIN_SPATIAL_BLOCKS = 2           # keep both v7x TensorCores fed
_VMEM_LIMIT_BYTES = 32 * 1024 * 1024   # safe on v5e/v6e/v7x, fits ~16 MiB live


def _cdiv(a, b):
    return -(-a // b)


def _round_up(a, b):
    return _cdiv(a, b) * b


def _sublane_mult(*dtypes):
    """Minimum sublane multiple so every operand's block uses native tiling."""
    m = 8
    for dt in dtypes:
        m = max(m, 32 // jnp.dtype(dt).itemsize)   # f32→8, bf16→16, int8→32
    return m


def _tiling(n_elem, sublane_mult):
    """Return (rows, tile_rows, n_blocks) for a flat element count."""
    rows = _cdiv(n_elem, _LANES)
    # Aim for at least _MIN_SPATIAL_BLOCKS blocks on the 'parallel' axis
    # (v7x has 2 TCs), capped at the 2 MiB target block size.
    want = _round_up(_cdiv(rows, _MIN_SPATIAL_BLOCKS), sublane_mult)
    tile_rows = min(_TARGET_TILE_ROWS, want)
    if tile_rows >= rows:
        tile_rows = rows                     # single full-extent block
    n_blocks = _cdiv(rows, tile_rows)        # ragged last block is allowed
    return rows, tile_rows, n_blocks


def _to_2d(a, rows):
    """View a flat/ND array as (rows, 128); zero-copy when n % 128 == 0."""
    n = a.size
    flat = a.reshape(-1)
    padded_n = rows * _LANES
    if padded_n != n:
        # TODO(synk): element counts not a multiple of 128 pay one pad copy.
        flat = jnp.pad(flat, (0, padded_n - n))
    return flat.reshape(rows, _LANES)


def _from_2d(a2, n, shape):
    if a2.size != n:
        return a2.reshape(-1)[:n].reshape(shape)
    return a2.reshape(shape)


# ----------------------------------------------------------------------------
# Single-timestep kernel (one call of STOLO.forward)
# ----------------------------------------------------------------------------
def _stolo_step_kernel(x_ref, u_ref, s_ref, u_out_ref):
    u = u_ref[...] * (1.0 / TAU) + x_ref[...]
    spiked = u >= V_THRESHOLD                       # one compare drives both outputs
    s_ref[...] = spiked.astype(s_ref.dtype)
    u_out_ref[...] = jnp.where(spiked, jnp.zeros_like(u), u)   # == u * (1 - s)


def stolo_forward(x, u_state, spike_dtype=None):
    """One STOLO step.

    x: float array; u_state: array broadcastable to x.shape (or scalar).
    Returns (spikes, new_u_state). spikes dtype = spike_dtype (default x.dtype).
    """
    spike_dtype = x.dtype if spike_dtype is None else jnp.dtype(spike_dtype)
    shape, n = x.shape, x.size
    u_state = jnp.broadcast_to(jnp.asarray(u_state, x.dtype), shape)

    rows, tile_rows, n_blocks = _tiling(n, _sublane_mult(x.dtype, spike_dtype))
    x2 = _to_2d(x, rows)
    u2 = _to_2d(u_state, rows)

    blk = pl.BlockSpec((tile_rows, _LANES), lambda i: (i, 0))

    s2, u_out2 = pl.pallas_call(
        _stolo_step_kernel,
        out_shape=(
            jax.ShapeDtypeStruct((rows, _LANES), spike_dtype),
            jax.ShapeDtypeStruct((rows, _LANES), x.dtype),
        ),
        grid=(n_blocks,),
        in_specs=[blk, blk],
        out_specs=(blk, blk),
        input_output_aliases={1: 1},                 # donate u_state -> u_out
        compiler_params=pltpu.CompilerParams(
            dimension_semantics=("parallel",),
            vmem_limit_bytes=_VMEM_LIMIT_BYTES),
    )(x2, u2)

    return _from_2d(s2, n, shape), _from_2d(u_out2, n, shape)


# ----------------------------------------------------------------------------
# Fused multi-timestep kernel: T sequential STOLO steps in one pallas_call.
# Membrane state lives in the resident output block (constant block index
# along the 'arbitrary' time axis) so u never round-trips through HBM
# between steps.
# ----------------------------------------------------------------------------
def _stolo_fused_kernel(x_ref, u0_ref, s_ref, u_ref):
    @pl.when(pl.program_id(1) == 0)
    def _():
        u_ref[...] = u0_ref[...]            # load initial membrane state once

    u = u_ref[...] * (1.0 / TAU) + x_ref[0]
    spiked = u >= V_THRESHOLD
    s_ref[0] = spiked.astype(s_ref.dtype)
    u_ref[...] = jnp.where(spiked, jnp.zeros_like(u), u)   # stays resident;
                                                           # HBM write only after last t


def stolo_forward_fused(xs, u_state, spike_dtype=None):
    """Run T STOLO steps. xs: (T, *shape); u_state: (*shape) or scalar.

    Returns (spikes of shape (T, *shape) in spike_dtype, final u_state).
    Numerically identical to calling stolo_forward T times in sequence.
    """
    spike_dtype = xs.dtype if spike_dtype is None else jnp.dtype(spike_dtype)
    T = xs.shape[0]
    step_shape = xs.shape[1:]
    n = xs[0].size
    u_state = jnp.broadcast_to(jnp.asarray(u_state, xs.dtype), step_shape)

    rows, tile_rows, n_blocks = _tiling(n, _sublane_mult(xs.dtype, spike_dtype))
    padded_n = rows * _LANES

    xs2 = xs.reshape(T, -1)
    if padded_n != n:
        # TODO(synk): non-128-aligned element counts pay one pad copy here.
        xs2 = jnp.pad(xs2, ((0, 0), (0, padded_n - n)))
    xs3 = xs2.reshape(T, rows, _LANES)
    u2 = _to_2d(u_state, rows)

    grid = (n_blocks, T)                    # spatial outer (parallel), time inner
    x_spec = pl.BlockSpec((1, tile_rows, _LANES), lambda i, t: (t, i, 0))
    u_spec = pl.BlockSpec((tile_rows, _LANES), lambda i, t: (i, 0))

    s3, u_out2 = pl.pallas_call(
        _stolo_fused_kernel,
        out_shape=(
            jax.ShapeDtypeStruct((T, rows, _LANES), spike_dtype),
            jax.ShapeDtypeStruct((rows, _LANES), xs.dtype),
        ),
        grid=grid,
        in_specs=[x_spec, u_spec],
        out_specs=(x_spec, u_spec),
        input_output_aliases={1: 1},                 # donate u_state -> u_out
        compiler_params=pltpu.CompilerParams(
            dimension_semantics=("parallel", "arbitrary"),
            vmem_limit_bytes=_VMEM_LIMIT_BYTES),
    )(xs3, u2)

    if padded_n != n:
        s = s3.reshape(T, -1)[:, :n].reshape((T,) + step_shape)
    else:
        s = s3.reshape((T,) + step_shape)
    u_out = _from_2d(u_out2, n, step_shape)
    return s, u_out


# ----------------------------------------------------------------------------
# Pure-JAX reference
# ----------------------------------------------------------------------------
def stolo_reference(x, u_state):
    u = u_state / TAU + x
    s = (u - V_THRESHOLD >= 0.0).astype(x.dtype)
    return s, u * (1.0 - s)


if __name__ == "__main__":
    key = jax.random.PRNGKey(0)
    B, C, H, W = 2, 4, 16, 16
    x = jax.random.normal(key, (B, C, H, W), dtype=jnp.float32) * 1.5

    # initial membrane state self.u = 0.0 (broadcast to the input shape)
    u0 = jnp.zeros((B, C, H, W), dtype=jnp.float32)

    # --- single-step kernel, called twice (stateful-module usage) ---
    s1, u1 = stolo_forward(x, u0)
    s2, u2 = stolo_forward(x, u1)

    # --- fused 2-timestep kernel (same input each step, as above) ---
    xs = jnp.stack([x, x], axis=0)
    s_fused, u_fused = stolo_forward_fused(xs, u0)

    # --- narrow-spike (int8) variants: bandwidth-optimized interface ---
    s1_i8, u1_i8 = stolo_forward(x, u0, spike_dtype=jnp.int8)
    sf_i8, uf_i8 = stolo_forward_fused(xs, u0, spike_dtype=jnp.int8)

    jax.block_until_ready((s1, u1, s2, u2, s_fused, u_fused,
                           s1_i8, u1_i8, sf_i8, uf_i8))

    # correctness checks against the pure-JAX reference
    rs1, ru1 = stolo_reference(x, u0)
    rs2, ru2 = stolo_reference(x, ru1)
    assert jnp.allclose(s1, rs1) and jnp.allclose(u1, ru1)
    assert jnp.allclose(s2, rs2) and jnp.allclose(u2, ru2)
    assert jnp.allclose(s_fused[0], rs1) and jnp.allclose(s_fused[1], rs2)
    assert jnp.allclose(u_fused, ru2)
    assert jnp.array_equal(s1_i8, rs1.astype(jnp.int8))
    assert jnp.allclose(u1_i8, ru1)
    assert jnp.array_equal(sf_i8[0], rs1.astype(jnp.int8))
    assert jnp.array_equal(sf_i8[1], rs2.astype(jnp.int8))
    assert jnp.allclose(uf_i8, ru2)

    print("KERNEL_OK")
</pallas_src>

<mosaic_0001>
module attributes {stable_mosaic.version = 11 : i64} {
  func.func @_stolo_step_kernel(%arg0: i32, %arg1: memref<8x128xf32, #tpu.memory_space<vmem>>, %arg2: memref<8x128xf32, #tpu.memory_space<vmem>>, %arg3: memref<8x128xf32, #tpu.memory_space<vmem>>, %arg4: memref<8x128xf32, #tpu.memory_space<vmem>>) attributes {dimension_semantics = [#tpu.dimension_semantics<parallel>], iteration_bounds = array<i64: 2>, scalar_prefetch = 0 : i64, scratch_operands = 0 : i64, tpu.core_type = #tpu.core_type<tc>, window_params = [{transform_indices = @transform_0, window_bounds = array<i64: 8, 128>}, {transform_indices = @transform_1, window_bounds = array<i64: 8, 128>}, {transform_indices = @transform_2, window_bounds = array<i64: 8, 128>}, {transform_indices = @transform_3, window_bounds = array<i64: 8, 128>}]} {
    %c0 = arith.constant 0 : index
    %c0_0 = arith.constant 0 : index
    %0 = vector.load %arg2[%c0, %c0_0] : memref<8x128xf32, #tpu.memory_space<vmem>>, vector<8x128xf32>
    %cst = arith.constant 5.000000e-01 : f32
    %1 = vector.broadcast %cst : f32 to vector<8x128xf32>
    %2 = arith.mulf %0, %1 : vector<8x128xf32>
    %c0_1 = arith.constant 0 : index
    %c0_2 = arith.constant 0 : index
    %3 = vector.load %arg1[%c0_1, %c0_2] : memref<8x128xf32, #tpu.memory_space<vmem>>, vector<8x128xf32>
    %4 = arith.addf %2, %3 : vector<8x128xf32>
    %cst_3 = arith.constant 1.000000e+00 : f32
    %5 = vector.broadcast %cst_3 : f32 to vector<8x128xf32>
    %6 = arith.cmpf oge, %4, %5 : vector<8x128xf32>
    %7 = arith.extui %6 : vector<8x128xi1> to vector<8x128xi32>
    %8 = arith.sitofp %7 : vector<8x128xi32> to vector<8x128xf32>
    %c0_4 = arith.constant 0 : index
    %c0_5 = arith.constant 0 : index
    %9 = vector.load %arg3[%c0_4, %c0_5] : memref<8x128xf32, #tpu.memory_space<vmem>>, vector<8x128xf32>
    tpu.vector_store %arg3[%c0_4, %c0_5], %8 {strides = array<i32>} : memref<8x128xf32, #tpu.memory_space<vmem>>, vector<8x128xf32>,
    %cst_6 = arith.constant 0.000000e+00 : f32
    %10 = vector.broadcast %cst_6 : f32 to vector<8x128xf32>
    %11 = arith.select %6, %10, %4 : vector<8x128xi1>, vector<8x128xf32>
    %c0_7 = arith.constant 0 : index
    %c0_8 = arith.constant 0 : index
    %12 = vector.load %arg4[%c0_7, %c0_8] : memref<8x128xf32, #tpu.memory_space<vmem>>, vector<8x128xf32>
    tpu.vector_store %arg4[%c0_7, %c0_8], %11 {strides = array<i32>} : memref<8x128xf32, #tpu.memory_space<vmem>>, vector<8x128xf32>,
    return
  }
  func.func @transform_0(%arg0: i32) -> (i32, i32) {
    %c0_i32 = arith.constant 0 : i32
    %c0_i32_0 = arith.constant 0 : i32
    return %arg0, %c0_i32 : i32, i32
  }
  func.func @transform_1(%arg0: i32) -> (i32, i32) {
    %c0_i32 = arith.constant 0 : i32
    %c0_i32_0 = arith.constant 0 : i32
    return %arg0, %c0_i32 : i32, i32
  }
  func.func @transform_2(%arg0: i32) -> (i32, i32) {
    %c0_i32 = arith.constant 0 : i32
    %c0_i32_0 = arith.constant 0 : i32
    return %arg0, %c0_i32 : i32, i32
  }
  func.func @transform_3(%arg0: i32) -> (i32, i32) {
    %c0_i32 = arith.constant 0 : i32
    %c0_i32_0 = arith.constant 0 : i32
    return %arg0, %c0_i32 : i32, i32
  }
}

</mosaic_0001>

<llo_original>
// kernel: tpu_custom_call.1
$region0: #{tpu_custom_call.1}
  #allocation0 [shape = 'u32[]', space=smem, size = 0x4, offset = 0x4, fixed_abs, tag = 'smem constant byte address 0x4 - core index']
  #allocation1 [shape = 'u32[144,128]{1,0:T(1,128)}', space=vmem, size = 0x12000, scoped, tag = 'internal scratch']
  %s0 = inlined_call_operand.vmem [shape: f32[16,128], index: 0, kind: input, shape index: {}]
  %s1 = inlined_call_operand.hbm [shape: f32[16,128], index: 1, kind: input, shape index: {}, may-alias: {1,3}]
  %s2 = inlined_call_operand.hbm [shape: f32[16,128], index: 2, kind: output, shape index: {0}]
  %s3 = inlined_call_operand.hbm [shape: f32[16,128], index: 3, kind: output, shape index: {1}, may-alias: {1,3}]
  %4 = xla_tuple %s2, %s3
  %s5 = sld [smem:[#allocation0]]
  $region53: #{tpu_custom_call.1} parent=0
    _
  %s7 = ssub.s32 1, %s5
  %s8 = scalar_select 0, %s7, %s5
  $region1: #{tpu_custom_call.1} parent=0
    #allocation2 [shape = 'u8[8192]{0}', space=vmem, size = 0x2000, scoped, tag = 'input window, operand 1']
    #allocation3 [shape = 's32[2]{0}', space=sflag, size = 0x8, scoped, tag = 'scoped memory for tpu_custom_call.1']
    #allocation4 [shape = 's32[2]{0}', space=sflag, size = 0x8, scoped, tag = 'scoped memory for tpu_custom_call.1']
    #allocation5 [shape = 'u8[8192]{0}', space=vmem, size = 0x2000, scoped, tag = 'output window, operand 0']
    #allocation6 [shape = 'u8[8192]{0}', space=vmem, size = 0x2000, scoped, tag = 'output window, operand 1']
    #allocation7 [shape = 's32[2]{0}', space=sflag, size = 0x8, scoped, tag = 'scoped memory for tpu_custom_call.1']
    %9 = vsyncpa [#allocation3], 0
    %s10 = scalar_lea.sflag [#allocation3], 1
    %11 = vsyncpa %s10, 0
    %12 = vsyncpa [#allocation4], 0
    %s13 = scalar_lea.sflag [#allocation4], 1
    %14 = vsyncpa %s13, 0
    %15 = vsyncpa [#allocation7], 0
    %s16 = scalar_lea.sflag [#allocation7], 1
    %17 = vsyncpa %s16, 0
    loop: start=0, step=1, limit=4
    $region2: #{tpu_custom_call.1} parent=1 // loop_pre_header
      _
    $region3: #{tpu_custom_call.1} parent=1 // loop_header
      %s19 = sphi 0, %s23
      %p20 = scmp.ge.s32.totalorder %s19, 4
      %s29 = sphi 0, %s31
      %s32 = sphi 0, %s29
      %s33 = sphi 0, %s32
      %s49 = sphi 0, %s33
      %s55 = sphi 0, %s57
      %s58 = sphi 0, %s55
      %s59 = sphi 0, %s58
      %s75 = sphi 0, %s59
      %s81 = sphi 0, %s83
      %s84 = sphi 0, %s81
      %s85 = sphi 0, %s84
      %s101 = sphi 0, %s85
      %s107 = sphi 0, %s109
      %s110 = sphi 0, %s107
      %s111 = sphi 0, %s110
      %s127 = sphi 0, %s111
    $region4: #{tpu_custom_call.1} parent=1 // loop_header_branch
      %22 = sbr.rel (%p20) target = $region8
    $region5: #{tpu_custom_call.1} parent=1 // loop_body
      %s24 = ssub.s32 %s19, 1
      %s25 = ssub.s32 %s19, 2
      %s26 = sadd.s32 %s19, 1
      %s27 = ssub.s32 %s19, %s26
      %p28 = scmp.eq.s32.totalorder %s27, 0
      %s30 = sadd.s32 %s29, 1
      %s31 = scalar_select %p28, %s29, %s30
      %p34 = pneg %p28
      %p35 = scmp.eq.s32.totalorder %s19, 1
      %p36 = por %p34, %p35
      %p37 = scmp.ne.s32.totalorder %s29, %s32
      %p38 = scmp.eq.s32.totalorder %s19, 0
      %p39 = por %p37, %p38
      %p40 = scmp.ne.s32.totalorder %s29, %s32
      %p41 = scmp.eq.s32.totalorder %s24, 1
      %p42 = por %p40, %p41
      %p43 = scmp.ne.s32.totalorder %s32, %s33
      %p44 = scmp.eq.s32.totalorder %s24, 0
      %p45 = por %p43, %p44
      %p46 = scmp.ne.s32.totalorder %s32, %s33
      %p47 = scmp.eq.s32.totalorder %s25, 1
      %p48 = por %p46, %p47
      %p50 = scmp.ne.s32.totalorder %s33, %s49
      %p51 = scmp.eq.s32.totalorder %s25, 0
      %p52 = por %p50, %p51
      %s53 = ssub.s32 %s19, %s26
      %p54 = scmp.eq.s32.totalorder %s53, 0
      %s56 = sadd.s32 %s55, 1
      %s57 = scalar_select %p54, %s55, %s56
      %p60 = pneg %p54
      %p61 = scmp.eq.s32.totalorder %s19, 1
      %p62 = por %p60, %p61
      %p63 = scmp.ne.s32.totalorder %s55, %s58
      %p64 = scmp.eq.s32.totalorder %s19, 0
      %p65 = por %p63, %p64
      %p66 = scmp.ne.s32.totalorder %s55, %s58
      %p67 = scmp.eq.s32.totalorder %s24, 1
      %p68 = por %p66, %p67
      %p69 = scmp.ne.s32.totalorder %s58, %s59
      %p70 = scmp.eq.s32.totalorder %s24, 0
      %p71 = por %p69, %p70
      %p72 = scmp.ne.s32.totalorder %s58, %s59
      %p73 = scmp.eq.s32.totalorder %s25, 1
      %p74 = por %p72, %p73
      %p76 = scmp.ne.s32.totalorder %s59, %s75
      %p77 = scmp.eq.s32.totalorder %s25, 0
      %p78 = por %p76, %p77
      %s79 = ssub.s32 %s19, %s26
      %p80 = scmp.eq.s32.totalorder %s79, 0
      %s82 = sadd.s32 %s81, 1
      %s83 = scalar_select %p80, %s81, %s82
      %p86 = pneg %p80
      %p87 = scmp.eq.s32.totalorder %s19, 1
      %p88 = por %p86, %p87
      %p89 = scmp.ne.s32.totalorder %s81, %s84
      %p90 = scmp.eq.s32.totalorder %s19, 0
      %p91 = por %p89, %p90
      %p92 = scmp.ne.s32.totalorder %s81, %s84
      %p93 = scmp.eq.s32.totalorder %s24, 1
      %p94 = por %p92, %p93
      %p95 = scmp.ne.s32.totalorder %s84, %s85
      %p96 = scmp.eq.s32.totalorder %s24, 0
      %p97 = por %p95, %p96
      %p98 = scmp.ne.s32.totalorder %s84, %s85
      %p99 = scmp.eq.s32.totalorder %s25, 1
      %p100 = por %p98, %p99
      %p102 = scmp.ne.s32.totalorder %s85, %s101
      %p103 = scmp.eq.s32.totalorder %s25, 0
      %p104 = por %p102, %p103
      %s105 = ssub.s32 %s19, %s26
      %p106 = scmp.eq.s32.totalorder %s105, 0
      %s108 = sadd.s32 %s107, 1
      %s109 = scalar_select %p106, %s107, %s108
      %p112 = pneg %p106
      %p113 = scmp.eq.s32.totalorder %s19, 1
      %p114 = por %p112, %p113
      %p115 = scmp.ne.s32.totalorder %s107, %s110
      %p116 = scmp.eq.s32.totalorder %s19, 0
      %p117 = por %p115, %p116
      %p118 = scmp.ne.s32.totalorder %s107, %s110
      %p119 = scmp.eq.s32.totalorder %s24, 1
      %p120 = por %p118, %p119
      %p121 = scmp.ne.s32.totalorder %s110, %s111
      %p122 = scmp.eq.s32.totalorder %s24, 0
      %p123 = por %p121, %p122
      %p124 = scmp.ne.s32.totalorder %s110, %s111
      %p125 = scmp.eq.s32.totalorder %s25, 1
      %p126 = por %p124, %p125
      %p128 = scmp.ne.s32.totalorder %s111, %s127
      %p129 = scmp.eq.s32.totalorder %s25, 0
      %p130 = por %p128, %p129
      %p131 = scmp.le.s32.totalorder 1, %s19
      %p132 = scmp.lt.s32.totalorder %s19, 3
      %p133 = pnand %p131, %p132
      %p134 = pneg %p133
      // Predicated region
      $region9: #{tpu_custom_call.1} parent=5 // pred_check
        _
      $region10: #{tpu_custom_call.1} parent=5 // pred_check_branch
        %136 = sbr.rel (%p133) target = $region12
      $region11: #{tpu_custom_call.1} parent=5 // pred_region
        %s137 = ssub.s32 %s19, 1
      $region12: #{tpu_custom_call.1} parent=5 // pred_fallthru
        _
      %p138 = scmp.lt.s32.totalorder %s19, 2
      // Predicated region
      $region13: #{tpu_custom_call.1} parent=5 // pred_check
        %p139 = pneg %p138
      $region14: #{tpu_custom_call.1} parent=5 // pred_check_branch
        %141 = sbr.rel (%p139) target = $region16
      $region15: #{tpu_custom_call.1} parent=5 // pred_region
        // Predicated region
        $region17: #{tpu_custom_call.1} parent=15 // pred_check
          %p142 = pneg %p39
        $region18: #{tpu_custom_call.1} parent=15 // pred_check_branch
          %144 = sbr.rel (%p142) target = $region20
        $region19: #{tpu_custom_call.1} parent=15 // pred_region
          %p145 = scmp.lt.s32.totalorder %s19, 1
          %s146 = scalar_select %p145, %s19, 1
          %s147 = smul.addr %s146, 8
          %s148 = scalar_lea.vmem %s0, %s147
        $region20: #{tpu_custom_call.1} parent=15 // pred_fallthru
          _
        // Predicated region
        $region21: #{tpu_custom_call.1} parent=15 // pred_check
          %p149 = pneg %p65
        $region22: #{tpu_custom_call.1} parent=15 // pred_check_branch
          %151 = sbr.rel (%p149) target = $region24
        $region23: #{tpu_custom_call.1} parent=15 // pred_region
          %s152 = sand.u32 %s55, 1
          %s153 = scalar_lea.sflag [#allocation3], %s152
          %s154 = sand.u32 %s55, 1
          %s155 = smul.addr %s154, 8
          %s156 = scalar_lea.vmem [#allocation2], %s155
          %s158 = ssub.s32 128, 128
          %159 = vsyncadd %s153, %s158
          %s160 = smul.addr %s19, 128
          %s161 = scalar_lea.hbm %s1, %s160
          %s163 = sshll.u32 %s156, 4
          %s164 = int_to_ptr.vmem [resolvable:$true] %s163
          %166 = dma.hbm_to_vmem [thread:$0]  %s161, 128, %s164, %s153
        $region24: #{tpu_custom_call.1} parent=15 // pred_fallthru
          _
      $region16: #{tpu_custom_call.1} parent=5 // pred_fallthru
        _
      %p167 = scmp.le.s32.totalorder 1, %s19
      %p168 = scmp.lt.s32.totalorder %s19, 3
      %p169 = pnand %p167, %p168
      %p170 = pneg %p169
      // Predicated region
      $region25: #{tpu_custom_call.1} parent=5 // pred_check
        _
      $region26: #{tpu_custom_call.1} parent=5 // pred_check_branch
        %172 = sbr.rel (%p169) target = $region28
      $region27: #{tpu_custom_call.1} parent=5 // pred_region
        %s173 = ssub.s32 %s19, 1
        %s174 = sand.u32 %s58, 1
        %s175 = scalar_lea.sflag [#allocation3], %s174
        %s176 = sand.u32 %s58, 1
        %s177 = smul.addr %s176, 8
        %s178 = scalar_lea.vmem [#allocation2], %s177
        // Predicated region
        $region29: #{tpu_custom_call.1} parent=27 // pred_check
          %p179 = pneg %p71
        $region30: #{tpu_custom_call.1} parent=27 // pred_check_branch
          %181 = sbr.rel (%p179) target = $region32
        $region31: #{tpu_custom_call.1} parent=27 // pred_region
          %182 = dma.done %s175, 128
        $region32: #{tpu_custom_call.1} parent=27 // pred_fallthru
          _
        %p183 = scmp.lt.s32.totalorder %s24, 1
        %s184 = scalar_select %p183, %s24, 1
        %s185 = smul.addr %s184, 8
        %s186 = scalar_lea.vmem %s0, %s185
        %p187 = pneg %p45
        %p188 = pneg %p42
        %s189 = sand.u32 %s58, 1
        %s190 = scalar_lea.sflag [#allocation3], %s189
        %s191 = sand.u32 %s58, 1
        %s192 = smul.addr %s191, 8
        %s193 = scalar_lea.vmem [#allocation2], %s192
        %p194 = pneg %p71
        %p195 = pneg %p68
        %p196 = pneg %p97
        %p197 = pneg %p94
        %s198 = sand.u32 %s84, 1
        %s199 = scalar_lea.sflag [#allocation4], %s198
        %s200 = sand.u32 %s84, 1
        %s201 = smul.addr %s200, 8
        %s202 = scalar_lea.vmem [#allocation5], %s201
        %p203 = pneg %p123
        %p204 = pneg %p120
        %s205 = sand.u32 %s110, 1
        %s206 = scalar_lea.sflag [#allocation7], %s205
        %s207 = sand.u32 %s110, 1
        %s208 = smul.addr %s207, 8
        %s209 = scalar_lea.vmem [#allocation6], %s208
        %p210 = scmp.lt.s32.totalorder %s24, 1
        %s211 = scalar_select %p210, %s24, 1
        %s212 = smul.addr %s211, 8
        %s213 = scalar_lea.vmem %s0, %s212
        %v214 = vld [vmem:[%s178] sm:$0xff]
        %v215 = vmul.f32 %v214, 0.5
        %v216 = vld [vmem:[%s213] sm:$0xff]
        %v217 = vadd.f32 %v215, %v216
        %vm218 = vcmp.ge.f32.partialorder %v217, 1.0
        %v219 = vsel %vm218, 1, 0
        %v220 = vcvt.s32.f32 %v219
        %221 = vst [vmem:[%s202] sm:$0xff] %v220
        %v222 = vsel %vm218, 0.0, %v217
        %223 = vst [vmem:[%s209] sm:$0xff] %v222
        %s224 = sand.u32 %s84, 1
        %s225 = scalar_lea.sflag [#allocation4], %s224
        %s226 = sand.u32 %s84, 1
        %s227 = smul.addr %s226, 8
        %s228 = scalar_lea.vmem [#allocation5], %s227
        %s229 = sand.u32 %s110, 1
        %s230 = scalar_lea.sflag [#allocation7], %s229
        %s231 = sand.u32 %s110, 1
        %s232 = smul.addr %s231, 8
        %s233 = scalar_lea.vmem [#allocation6], %s232
        // Predicated region
        $region33: #{tpu_custom_call.1} parent=27 // pred_check
          %p234 = pneg %p94
        $region34: #{tpu_custom_call.1} parent=27 // pred_check_branch
          %236 = sbr.rel (%p234) target = $region36
        $region35: #{tpu_custom_call.1} parent=27 // pred_region
          %s238 = ssub.s32 128, 128
          %239 = vsyncadd %s225, %s238
          %s240 = smul.addr %s24, 128
          %s241 = scalar_lea.hbm %s2, %s240
          %s243 = sshll.u32 %s228, 4
          %s244 = int_to_ptr.vmem [resolvable:$true] %s243
          %246 = dma.vmem_to_hbm [thread:$0]  %s244, 128, %s241, %s225
        $region36: #{tpu_custom_call.1} parent=27 // pred_fallthru
          _
        // Predicated region
        $region37: #{tpu_custom_call.1} parent=27 // pred_check
          %p247 = pneg %p120
        $region38: #{tpu_custom_call.1} parent=27 // pred_check_branch
          %249 = sbr.rel (%p247) target = $region40
        $region39: #{tpu_custom_call.1} parent=27 // pred_region
          %s251 = ssub.s32 128, 128
          %252 = vsyncadd %s230, %s251
          %s253 = smul.addr %s24, 128
          %s254 = scalar_lea.hbm %s3, %s253
          %s256 = sshll.u32 %s233, 4
          %s257 = int_to_ptr.vmem [resolvable:$true] %s256
          %259 = dma.vmem_to_hbm [thread:$0]  %s257, 128, %s254, %s230
        $region40: #{tpu_custom_call.1} parent=27 // pred_fallthru
          _
      $region28: #{tpu_custom_call.1} parent=5 // pred_fallthru
        _
      %p260 = scmp.le.s32.totalorder 2, %s19
      // Predicated region
      $region41: #{tpu_custom_call.1} parent=5 // pred_check
        %p261 = pneg %p260
      $region42: #{tpu_custom_call.1} parent=5 // pred_check_branch
        %263 = sbr.rel (%p261) target = $region44
      $region43: #{tpu_custom_call.1} parent=5 // pred_region
        %s264 = ssub.s32 %s19, 2
        // Predicated region
        $region45: #{tpu_custom_call.1} parent=43 // pred_check
          %p265 = pneg %p100
        $region46: #{tpu_custom_call.1} parent=43 // pred_check_branch
          %267 = sbr.rel (%p265) target = $region48
        $region47: #{tpu_custom_call.1} parent=43 // pred_region
          %s268 = sand.u32 %s85, 1
          %s269 = scalar_lea.sflag [#allocation4], %s268
          %s270 = sand.u32 %s85, 1
          %s271 = smul.addr %s270, 8
          %s272 = scalar_lea.vmem [#allocation5], %s271
          %273 = dma.done %s269, 128
        $region48: #{tpu_custom_call.1} parent=43 // pred_fallthru
          _
        // Predicated region
        $region49: #{tpu_custom_call.1} parent=43 // pred_check
          %p274 = pneg %p126
        $region50: #{tpu_custom_call.1} parent=43 // pred_check_branch
          %276 = sbr.rel (%p274) target = $region52
        $region51: #{tpu_custom_call.1} parent=43 // pred_region
          %s277 = sand.u32 %s111, 1
          %s278 = scalar_lea.sflag [#allocation7], %s277
          %s279 = sand.u32 %s111, 1
          %s280 = smul.addr %s279, 8
          %s281 = scalar_lea.vmem [#allocation6], %s280
          %282 = dma.done %s278, 128
        $region52: #{tpu_custom_call.1} parent=43 // pred_fallthru
          _
      $region44: #{tpu_custom_call.1} parent=5 // pred_fallthru
        _
    $region6: #{tpu_custom_call.1} parent=1 // loop_footer
      %s23 = sadd.s32 1, %s19
    $region7: #{tpu_custom_call.1} parent=1 // loop_footer_branch
      %18 = sbr.rel target = $region3
    $region8: #{tpu_custom_call.1} parent=1 // loop_exit
      _
    %283 = vsyncpa [#allocation3], 1
    %s284 = scalar_lea.sflag [#allocation3], 1
    %285 = vsyncpa %s284, 1
    %286 = vsyncpa [#allocation4], 1
    %s287 = scalar_lea.sflag [#allocation4], 1
    %288 = vsyncpa %s287, 1
    %289 = vsyncpa [#allocation7], 1
    %s290 = scalar_lea.sflag [#allocation7], 1
    %291 = vsyncpa %s290, 1

</llo_original>
